<compile_context>
chip_gen: v7x
topology: tpu7x:2x2x1
jax: 0.10.0
libtpu: 0.0.40
codegen_flags: <defaults>
</compile_context>

<pallas_src>
import jax
import jax.numpy as jnp
from jax.experimental import pallas as pl
from jax.experimental.pallas import tpu as pltpu

_LANES = 128  # vreg lane width: last dim of the slab -> unmasked vst


def _sigmoid_kernel(x_ref, o_ref):
    x = x_ref[...]
    # sigmoid(x) = 0.5 * (tanh(x * 0.5) + 1)
    # One EUP op per element (vs exp + f32 divide), VPU does the cheap mul/add.
    o_ref[...] = (
        jnp.float32(0.5) * (jnp.tanh(x * jnp.float32(0.5)) + jnp.float32(1.0))
    ).astype(o_ref.dtype)


def _vmem_sizes():
    """Per-generation (block_bytes, vmem_limit_bytes)."""
    try:
        vmem = pltpu.get_tpu_info().vmem_capacity_bytes
    except Exception:
        vmem = 64 * 1024 * 1024  # conservative (v7x-sized) default
    if vmem >= 96 * 1024 * 1024:
        # v5e / v6e: 128 MiB VMEM -> 16 MiB blocks; 2 arrays x 2 bufs = 64 MiB.
        return 16 * 1024 * 1024, 96 * 1024 * 1024
    # v7x: 64 MiB VMEM per TC -> 8 MiB blocks; 2 x 2 x 8 = 32 MiB + headroom.
    return 8 * 1024 * 1024, 48 * 1024 * 1024


def _pick_tile_rows(R, C, itemsize, block_bytes):
    """Rows per block: <= block_bytes, >=4 even grid steps when possible."""
    bytes_per_row = C * itemsize
    steps = max(1, pl.cdiv(R * bytes_per_row, block_bytes))
    if R >= 32:
        steps = max(steps, 4)          # keep the software pipeline busy
    if steps > 1 and steps % 2 == 1:
        steps += 1                     # even grid: balances v7x's 2 TensorCores
    tm = pl.cdiv(R, steps)
    if R <= 8 or tm >= R:
        return R                       # full row extent: always a legal block
    return max(8, pl.cdiv(tm, 8) * 8)  # multiple of 8 sublanes; ragged tail OK


def _tiled_sigmoid_2d(x2d: jax.Array) -> jax.Array:
    R, C = x2d.shape
    block_bytes, vmem_limit = _vmem_sizes()
    tm = _pick_tile_rows(R, C, x2d.dtype.itemsize, block_bytes)
    grid = (pl.cdiv(R, tm),)
    return pl.pallas_call(
        _sigmoid_kernel,
        out_shape=jax.ShapeDtypeStruct((R, C), x2d.dtype),
        grid_spec=pltpu.PrefetchScalarGridSpec(
            num_scalar_prefetch=0,
            grid=grid,
            in_specs=[pl.BlockSpec((tm, C), lambda i: (i, 0))],
            out_specs=pl.BlockSpec((tm, C), lambda i: (i, 0)),
        ),
        # Shape/dtype-preserving elementwise op: let XLA reuse the input HBM
        # buffer when it is donatable (no-op cost otherwise).
        input_output_aliases={0: 0},
        compiler_params=pltpu.CompilerParams(
            dimension_semantics=("parallel",),   # shards grid across TCs on v7x
            vmem_limit_bytes=vmem_limit,
        ),
    )(x2d)


def sigmoid_pallas(x: jax.Array) -> jax.Array:
    assert x.ndim == 2 and x.dtype == jnp.float32
    M, N = x.shape
    total = M * N
    pad = (-total) % _LANES
    flat = x.reshape(total)
    if pad:
        # Pad a few elements instead of running a masked-store (N<128) path.
        flat = jnp.pad(flat, (0, pad))
    rows = (total + pad) // _LANES
    out2d = _tiled_sigmoid_2d(flat.reshape(rows, _LANES))
    return out2d.reshape(-1)[:total].reshape(M, N)


if __name__ == "__main__":
    key = jax.random.PRNGKey(0)
    # Small 2-D input consistent with the module annotation: [seq=8, hidden=32]
    x = jax.random.normal(key, (8, 32), dtype=jnp.float32)

    out = jax.block_until_ready(sigmoid_pallas(x))

    ref = jax.nn.sigmoid(x)
    assert out.shape == ref.shape and out.dtype == ref.dtype
    assert jnp.allclose(out, ref, atol=1e-6, rtol=1e-6)
    print("KERNEL_OK")
</pallas_src>

<mosaic_0001>
module attributes {stable_mosaic.version = 11 : i64} {
  func.func @_sigmoid_kernel(%arg0: i32, %arg1: memref<2x128xf32, #tpu.memory_space<vmem>>, %arg2: memref<2x128xf32, #tpu.memory_space<vmem>>) attributes {dimension_semantics = [#tpu.dimension_semantics<parallel>], iteration_bounds = array<i64: 1>, scalar_prefetch = 0 : i64, scratch_operands = 0 : i64, tpu.core_type = #tpu.core_type<tc>, window_params = [{transform_indices = @transform_0, window_bounds = array<i64: 2, 128>}, {transform_indices = @transform_1, window_bounds = array<i64: 2, 128>}]} {
    %c0 = arith.constant 0 : index
    %c0_0 = arith.constant 0 : index
    %0 = vector.load %arg1[%c0, %c0_0] : memref<2x128xf32, #tpu.memory_space<vmem>>, vector<2x128xf32>
    %cst = arith.constant 5.000000e-01 : f32
    %1 = vector.broadcast %cst : f32 to vector<2x128xf32>
    %2 = arith.mulf %0, %1 : vector<2x128xf32>
    %3 = math.tanh %2 : vector<2x128xf32>
    %cst_1 = arith.constant 1.000000e+00 : f32
    %4 = vector.broadcast %cst_1 : f32 to vector<2x128xf32>
    %5 = arith.addf %3, %4 : vector<2x128xf32>
    %cst_2 = arith.constant 5.000000e-01 : f32
    %6 = vector.broadcast %cst_2 : f32 to vector<2x128xf32>
    %7 = arith.mulf %6, %5 : vector<2x128xf32>
    %c0_3 = arith.constant 0 : index
    %c0_4 = arith.constant 0 : index
    %8 = vector.load %arg2[%c0_3, %c0_4] : memref<2x128xf32, #tpu.memory_space<vmem>>, vector<2x128xf32>
    tpu.vector_store %arg2[%c0_3, %c0_4], %7 {strides = array<i32>} : memref<2x128xf32, #tpu.memory_space<vmem>>, vector<2x128xf32>,
    return
  }
  func.func @transform_0(%arg0: i32) -> (i32, i32) {
    %c0_i32 = arith.constant 0 : i32
    %c0_i32_0 = arith.constant 0 : i32
    return %arg0, %c0_i32 : i32, i32
  }
  func.func @transform_1(%arg0: i32) -> (i32, i32) {
    %c0_i32 = arith.constant 0 : i32
    %c0_i32_0 = arith.constant 0 : i32
    return %arg0, %c0_i32 : i32, i32
  }
}

</mosaic_0001>

<llo_original>
// kernel: tpu_custom_call.1
$region0: #{tpu_custom_call.1}
  #allocation0 [shape = 'u32[]', space=smem, size = 0x4, offset = 0x4, fixed_abs, tag = 'smem constant byte address 0x4 - core index']
  #allocation1 [shape = 'u32[144,128]{1,0:T(1,128)}', space=vmem, size = 0x12000, scoped, tag = 'internal scratch']
  %s0 = inlined_call_operand.hbm [shape: f32[2,128], index: 0, kind: input, shape index: {}, may-alias: {0,1}]
  %s1 = inlined_call_operand.hbm [shape: f32[2,128], index: 1, kind: output, shape index: {}, may-alias: {0,1}]
  %s2 = sld [smem:[#allocation0]]
  $region18: #{tpu_custom_call.1} parent=0
    _
  %s4 = ssub.s32 1, %s2
  %s5 = scalar_select 0, %s4, %s2
  $region1: #{tpu_custom_call.1} parent=0
    #allocation2 [shape = 'u8[1024]{0}', space=vmem, size = 0x400, scoped, tag = 'input window, operand 0, single buffered']
    #allocation3 [shape = 's32[1]{0}', space=sflag, size = 0x4, scoped, tag = 'scoped memory for tpu_custom_call.1']
    #allocation4 [shape = 's32[1]{0}', space=sflag, size = 0x4, scoped, tag = 'scoped memory for tpu_custom_call.1']
    #allocation5 [shape = 'u8[1024]{0}', space=vmem, size = 0x400, scoped, tag = 'output window, operand 0, single buffered']
    %6 = vsyncpa [#allocation3], 0
    %7 = vsyncpa [#allocation4], 0
    // Predicated region
    $region2: #{tpu_custom_call.1} parent=1 // pred_check
      _
    $region3: #{tpu_custom_call.1} parent=1 // pred_check_branch
      %9 = sbr.rel (0) target = $region5
    $region4: #{tpu_custom_call.1} parent=1 // pred_region
      %s11 = ssub.s32 32, 32
      %12 = vsyncadd [#allocation3], %s11
      %s14 = sshll.u32 [#allocation2], 4
      %s15 = int_to_ptr.vmem [resolvable:$true] %s14
      %17 = dma.hbm_to_vmem [thread:$0]  %s0, 32, %s15, [#allocation3]
    $region5: #{tpu_custom_call.1} parent=1 // pred_fallthru
      _
    // Predicated region
    $region6: #{tpu_custom_call.1} parent=1 // pred_check
      _
    $region7: #{tpu_custom_call.1} parent=1 // pred_check_branch
      %19 = sbr.rel (0) target = $region9
    $region8: #{tpu_custom_call.1} parent=1 // pred_region
      %20 = dma.done [#allocation3], 32
    $region9: #{tpu_custom_call.1} parent=1 // pred_fallthru
      _
    %v21 = vld [vmem:[#allocation2] sm:$0x3]
    %v22 = vmul.f32 %v21, 0.5
    %v23 = vtanh.pop %v22
    %v24 = vadd.f32 %v23, 1.0
    %v25 = vmul.f32 %v24, 0.5
    %26 = vst [vmem:[#allocation5] sm:$0x3] %v25
    // Predicated region
    $region10: #{tpu_custom_call.1} parent=1 // pred_check
      _
    $region11: #{tpu_custom_call.1} parent=1 // pred_check_branch
      %28 = sbr.rel (0) target = $region13
    $region12: #{tpu_custom_call.1} parent=1 // pred_region
      %s30 = ssub.s32 32, 32
      %31 = vsyncadd [#allocation4], %s30
      %s33 = sshll.u32 [#allocation5], 4
      %s34 = int_to_ptr.vmem [resolvable:$true] %s33
      %36 = dma.vmem_to_hbm [thread:$0]  %s34, 32, %s1, [#allocation4]
    $region13: #{tpu_custom_call.1} parent=1 // pred_fallthru
      _
    // Predicated region
    $region14: #{tpu_custom_call.1} parent=1 // pred_check
      _
    $region15: #{tpu_custom_call.1} parent=1 // pred_check_branch
      %38 = sbr.rel (0) target = $region17
    $region16: #{tpu_custom_call.1} parent=1 // pred_region
      %39 = dma.done [#allocation4], 32
    $region17: #{tpu_custom_call.1} parent=1 // pred_fallthru
      _
    %40 = vsyncpa [#allocation3], 1
    %41 = vsyncpa [#allocation4], 1

</llo_original>
